<compile_context>
chip_gen: v7x
topology: tpu7x:2x2x1
jax: 0.10.0
libtpu: 0.0.40
codegen_flags: <defaults>
</compile_context>

<pallas_src>
import functools

import jax
import jax.numpy as jnp
from jax.experimental import pallas as pl
from jax.experimental.pallas import tpu as pltpu


def _label_smoothing_kernel(x_ref, tgt_ref, out_ref, *, confidence,
                            smooth_over_c, n_rows, tile_rows):
    i = pl.program_id(0)

    x = x_ref[...].astype(jnp.float32)        # (TM, C)
    tgt = tgt_ref[...]                        # (TM, 1) int32

    # Numerically-stable logsumexp per row (XLU reductions + EUP exp/log).
    m = jnp.max(x, axis=-1, keepdims=True)                       # (TM, 1)
    s = jnp.sum(jnp.exp(x - m), axis=-1, keepdims=True)          # (TM, 1)
    lse = m + jnp.log(s)                                         # (TM, 1)

    # sum(x_i) over classes (mean folded into smooth_over_c = smoothing / C).
    row_sum = jnp.sum(x, axis=-1, keepdims=True)                 # (TM, 1)

    # Gather x[i, tgt_i] via a masked sum (no dynamic gather on TPU).
    col_ids = jax.lax.broadcasted_iota(jnp.int32, x.shape, 1)    # (TM, C)
    x_tgt = jnp.sum(jnp.where(col_ids == tgt, x, 0.0),
                    axis=-1, keepdims=True)                      # (TM, 1)

    # Collapsed label-smoothed loss per row.
    loss = lse - confidence * x_tgt - smooth_over_c * row_sum    # (TM, 1)

    # Mask padded tail rows of the last tile (also kills NaN/inf from garbage).
    row_ids = jax.lax.broadcasted_iota(jnp.int32, loss.shape, 0)
    valid = (i * tile_rows + row_ids) < n_rows

    out_ref[0, 0] = jnp.sum(jnp.where(valid, loss, 0.0))         # partial sum


def _pick_row_tile(n, c, itemsize):
    # Keep the 2 double-buffered x tiles within ~16 MiB total so the kernel is
    # comfortable under every chip's scoped-VMEM budget (v5e default 16 MiB,
    # v7x 32/64 MiB) with the limit we request below.
    budget_per_tile = 8 * 1024 * 1024
    max_rows = max(8, budget_per_tile // max(1, c * itemsize))
    if max_rows >= n:
        return n                        # single tile: block == full dims
    return max(8, (max_rows // 8) * 8)  # respect the (8, 128) sublane rule


def label_smoothing_loss(x, target, smoothing=0.0, row_tile=None):
    """Pallas-TPU equivalent of LabelSmoothing(smoothing).forward(x, target)."""
    n, c = x.shape
    confidence = 1.0 - smoothing
    tgt2d = target.reshape(n, 1).astype(jnp.int32)

    tm = row_tile if row_tile is not None else _pick_row_tile(n, c, x.dtype.itemsize)
    nb = pl.cdiv(n, tm)

    kernel = functools.partial(
        _label_smoothing_kernel,
        confidence=confidence,
        smooth_over_c=smoothing / c,
        n_rows=n, tile_rows=tm)

    partials = pl.pallas_call(
        kernel,
        out_shape=jax.ShapeDtypeStruct((nb, 1), jnp.float32),
        grid=(nb,),
        in_specs=[
            pl.BlockSpec((tm, c), lambda i: (i, 0)),   # x tile   (VMEM, pipelined)
            pl.BlockSpec((tm, 1), lambda i: (i, 0)),   # targets  (VMEM, pipelined)
        ],
        out_specs=pl.BlockSpec((1, 1), lambda i: (i, 0),
                               memory_space=pltpu.MemorySpace.SMEM),
        compiler_params=pltpu.CompilerParams(
            dimension_semantics=("parallel",),
            vmem_limit_bytes=32 * 1024 * 1024),
    )(x, tgt2d)

    return jnp.sum(partials) / n


def _reference(x, target, smoothing):
    # Pure-JAX reference mirroring the PyTorch forward.
    logprobs = jax.nn.log_softmax(x.astype(jnp.float32), axis=-1)
    nll = -jnp.take_along_axis(logprobs, target[:, None], axis=-1)[:, 0]
    smooth = -jnp.mean(logprobs, axis=-1)
    return jnp.mean((1.0 - smoothing) * nll + smoothing * smooth)


if __name__ == "__main__":
    key = jax.random.PRNGKey(0)
    kx, kt, kx2, kt2, kx3, kt3 = jax.random.split(key, 6)
    smoothing = 0.1

    # Case 1: single tile (block == full dims), matches the module's [N, C] input.
    N, C = 8, 32
    x = jax.random.normal(kx, (N, C), dtype=jnp.float32)
    target = jax.random.randint(kt, (N,), 0, C, dtype=jnp.int32)
    loss = jax.block_until_ready(label_smoothing_loss(x, target, smoothing=smoothing))
    ref = _reference(x, target, smoothing)
    assert jnp.allclose(loss, ref, atol=1e-5, rtol=1e-5), (loss, ref)

    # Case 2: multi-block grid with a padded tail tile (exercises row tiling + mask).
    N2, C2 = 20, 256
    x2 = jax.random.normal(kx2, (N2, C2), dtype=jnp.float32)
    target2 = jax.random.randint(kt2, (N2,), 0, C2, dtype=jnp.int32)
    loss2 = jax.block_until_ready(
        label_smoothing_loss(x2, target2, smoothing=smoothing, row_tile=8))
    ref2 = _reference(x2, target2, smoothing)
    assert jnp.allclose(loss2, ref2, atol=1e-5, rtol=1e-5), (loss2, ref2)

    # Case 3: bf16 input path (in-kernel upcast, no wrapper-side cast).
    N3, C3 = 16, 128
    x3 = jax.random.normal(kx3, (N3, C3), dtype=jnp.bfloat16)
    target3 = jax.random.randint(kt3, (N3,), 0, C3, dtype=jnp.int32)
    loss3 = jax.block_until_ready(label_smoothing_loss(x3, target3, smoothing=smoothing))
    ref3 = _reference(x3, target3, smoothing)
    assert jnp.allclose(loss3, ref3, atol=2e-2, rtol=2e-2), (loss3, ref3)

    print("KERNEL_OK")
</pallas_src>

<mosaic_0001>
module attributes {stable_mosaic.version = 11 : i64} {
  func.func @_label_smoothing_kernel(%arg0: i32, %arg1: memref<8x32xf32, #tpu.memory_space<vmem>>, %arg2: memref<8x1xi32, #tpu.memory_space<vmem>>, %arg3: memref<1x1xf32, #tpu.memory_space<smem>>) attributes {dimension_semantics = [#tpu.dimension_semantics<parallel>], iteration_bounds = array<i64: 1>, scalar_prefetch = 0 : i64, scratch_operands = 0 : i64, tpu.core_type = #tpu.core_type<tc>, window_params = [{transform_indices = @transform_0, window_bounds = array<i64: 8, 32>}, {transform_indices = @transform_1, window_bounds = array<i64: 8, 1>}, {transform_indices = @transform_2, window_bounds = array<i64: 1, 1>}]} {
    %c0 = arith.constant 0 : index
    %c0_0 = arith.constant 0 : index
    %0 = vector.load %arg1[%c0, %c0_0] : memref<8x32xf32, #tpu.memory_space<vmem>>, vector<8x32xf32>
    %c0_1 = arith.constant 0 : index
    %c0_2 = arith.constant 0 : index
    %1 = vector.load %arg2[%c0_1, %c0_2] : memref<8x1xi32, #tpu.memory_space<vmem>>, vector<8x1xi32>
    %cst = arith.constant dense<0xFF800000> : vector<8xf32>
    %2 = vector.multi_reduction <maximumf>, %0, %cst [1] : vector<8x32xf32> to vector<8xf32>
    %3 = vector.shape_cast %2 : vector<8xf32> to vector<8x1xf32>
    %4 = vector.broadcast %3 : vector<8x1xf32> to vector<8x32xf32>
    %5 = arith.subf %0, %4 : vector<8x32xf32>
    %6 = math.exp %5 : vector<8x32xf32>
    %cst_3 = arith.constant dense<0.000000e+00> : vector<8xf32>
    %7 = vector.multi_reduction <add>, %6, %cst_3 [1] : vector<8x32xf32> to vector<8xf32>
    %8 = vector.shape_cast %7 : vector<8xf32> to vector<8x1xf32>
    %9 = math.log %8 : vector<8x1xf32>
    %10 = arith.addf %3, %9 : vector<8x1xf32>
    %cst_4 = arith.constant dense<0.000000e+00> : vector<8xf32>
    %11 = vector.multi_reduction <add>, %0, %cst_4 [1] : vector<8x32xf32> to vector<8xf32>
    %12 = vector.shape_cast %11 : vector<8xf32> to vector<8x1xf32>
    %13 = tpu.iota {dimensions = array<i32: 1>} : vector<8x32xi32>
    %14 = vector.broadcast %1 : vector<8x1xi32> to vector<8x32xi32>
    %15 = arith.cmpi eq, %13, %14 : vector<8x32xi32>
    %cst_5 = arith.constant 0.000000e+00 : f32
    %16 = vector.broadcast %cst_5 : f32 to vector<8x32xf32>
    %17 = arith.select %15, %0, %16 : vector<8x32xi1>, vector<8x32xf32>
    %cst_6 = arith.constant dense<0.000000e+00> : vector<8xf32>
    %18 = vector.multi_reduction <add>, %17, %cst_6 [1] : vector<8x32xf32> to vector<8xf32>
    %19 = vector.shape_cast %18 : vector<8xf32> to vector<8x1xf32>
    %cst_7 = arith.constant 0.899999976 : f32
    %20 = vector.broadcast %cst_7 : f32 to vector<8x1xf32>
    %21 = arith.mulf %20, %19 : vector<8x1xf32>
    %22 = arith.subf %10, %21 : vector<8x1xf32>
    %cst_8 = arith.constant 3.125000e-03 : f32
    %23 = vector.broadcast %cst_8 : f32 to vector<8x1xf32>
    %24 = arith.mulf %23, %12 : vector<8x1xf32>
    %25 = arith.subf %22, %24 : vector<8x1xf32>
    %26 = tpu.iota {dimensions = array<i32: 0>} : vector<8x1xi32>
    %c8_i32 = arith.constant 8 : i32
    %27 = arith.muli %arg0, %c8_i32 : i32
    %28 = vector.broadcast %27 : i32 to vector<8x1xi32>
    %29 = arith.addi %28, %26 : vector<8x1xi32>
    %c8_i32_9 = arith.constant 8 : i32
    %30 = vector.broadcast %c8_i32_9 : i32 to vector<8x1xi32>
    %31 = arith.cmpi slt, %29, %30 : vector<8x1xi32>
    %cst_10 = arith.constant 0.000000e+00 : f32
    %32 = vector.broadcast %cst_10 : f32 to vector<8x1xf32>
    %33 = arith.select %31, %25, %32 : vector<8x1xi1>, vector<8x1xf32>
    %34 = vector.shape_cast %33 : vector<8x1xf32> to vector<1x8x1xf32>
    %cst_11 = arith.constant dense<0.000000e+00> : vector<1xf32>
    %35 = vector.multi_reduction <add>, %34, %cst_11 [1, 2] : vector<1x8x1xf32> to vector<1xf32>
    %36 = vector.shape_cast %35 : vector<1xf32> to vector<1x1x1xf32>
    %37 = vector.extract %36[0, 0, 0] : f32 from vector<1x1x1xf32>
    %c0_12 = arith.constant 0 : index
    %c0_13 = arith.constant 0 : index
    %38 = memref.load %arg3[%c0_12, %c0_13] : memref<1x1xf32, #tpu.memory_space<smem>>
    memref.store %37, %arg3[%c0_12, %c0_13] : memref<1x1xf32, #tpu.memory_space<smem>>
    return
  }
  func.func @transform_0(%arg0: i32) -> (i32, i32) {
    %c0_i32 = arith.constant 0 : i32
    %c0_i32_0 = arith.constant 0 : i32
    return %arg0, %c0_i32 : i32, i32
  }
  func.func @transform_1(%arg0: i32) -> (i32, i32) {
    %c0_i32 = arith.constant 0 : i32
    %c0_i32_0 = arith.constant 0 : i32
    return %arg0, %c0_i32 : i32, i32
  }
  func.func @transform_2(%arg0: i32) -> (i32, i32) {
    %c0_i32 = arith.constant 0 : i32
    %c0_i32_0 = arith.constant 0 : i32
    return %arg0, %c0_i32 : i32, i32
  }
}

</mosaic_0001>

<llo_original>
// kernel: tpu_custom_call.1
$region0: #{tpu_custom_call.1}
  #allocation0 [shape = 'u32[]', space=smem, size = 0x4, offset = 0x4, fixed_abs, tag = 'smem constant byte address 0x4 - core index']
  #allocation1 [shape = 'u32[144,128]{1,0:T(1,128)}', space=vmem, size = 0x12000, scoped, tag = 'internal scratch']
  %s0 = inlined_call_operand.vmem [shape: f32[8,32], index: 0, kind: input, shape index: {}]
  %s1 = inlined_call_operand.vmem [shape: s32[8,1], index: 1, kind: input, shape index: {}]
  %s2 = inlined_call_operand.hbm [shape: f32[1,1], index: 2, kind: output, shape index: {}]
  %s3 = sld [smem:[#allocation0]]
  $region18: #{tpu_custom_call.1} parent=0
    _
  %s5 = ssub.s32 1, %s3
  %s6 = scalar_select 0, %s5, %s3
  $region1: #{tpu_custom_call.1} parent=0
    #allocation2 [shape = 'u8[512]{0}', space=smem, size = 0x200, scoped, tag = 'output window, operand 0, single buffered']
    #allocation3 [shape = 's32[1]{0}', space=sflag, size = 0x4, scoped, tag = 'scoped memory for tpu_custom_call.1']
    %7 = vsyncpa [#allocation3], 0
    // Predicated region
    $region2: #{tpu_custom_call.1} parent=1 // pred_check
      _
    $region3: #{tpu_custom_call.1} parent=1 // pred_check_branch
      %9 = sbr.rel (0) target = $region5
    $region4: #{tpu_custom_call.1} parent=1 // pred_region
      _
    $region5: #{tpu_custom_call.1} parent=1 // pred_fallthru
      _
    // Predicated region
    $region6: #{tpu_custom_call.1} parent=1 // pred_check
      _
    $region7: #{tpu_custom_call.1} parent=1 // pred_check_branch
      %11 = sbr.rel (0) target = $region9
    $region8: #{tpu_custom_call.1} parent=1 // pred_region
      _
    $region9: #{tpu_custom_call.1} parent=1 // pred_fallthru
      _
    %v12 = vld [vmem:[%s0] sm:$0xff]
    %v13 = vld [vmem:[%s1] sm:$0xff]
    %vm14 = vcmask 261120
    %v15 = vsel %vm14, %v12, -inf
    %16 = vmax.xlane.f32.xlu0 %v15
    %v17 = vpop.xlane.xlu0 %16
    %v18 = vsub.f32 %v12, %v17
    %v19 = vmul.f32 %v18, 1.442695
    %v20 = vpow.pop %v19
    %v21 = vsel %vm14, %v20, 0.0
    %22 = vadd.xlane.f32.xlu0 %v21
    %v23 = vpop.xlane.xlu0 %22
    %v24 = vlog2.pop %v23
    %v25 = vmul.f32 %v24, 0.6931472
    %v26 = vadd.f32 %v17, %v25
    %v27 = vsel %vm14, %v12, 0.0
    %28 = vadd.xlane.f32.xlu0 %v27
    %v29 = vpop.xlane.xlu0 %28
    %v30 = vlaneseq
    %v31 = vand.u32 %v30, 127
    %32 = vset.pattern.permute.xlu0 0
    %33 = vperm.xlu0 %32, %v13
    %v34 = vpop.permute.xlu0 %33
    %vm35 = vcmp.eq.s32.totalorder %v31, %v34
    %v36 = vsel %vm35, %v12, 0.0
    %v37 = vsel %vm14, %v36, 0.0
    %38 = vadd.xlane.f32.xlu0 %v37
    %v39 = vpop.xlane.xlu0 %38
    %v40 = vmul.f32 %v39, 0.9
    %v41 = vsub.f32 %v26, %v40
    %v42 = vmul.f32 %v29, 0.003125
    %v43 = vsub.f32 %v41, %v42
    %v44 = vlaneseq
    %v45 = vshrl.u32 %v44, 7
    %s46 = smul.u32 0, 8
    %v47 = vstv %s46
    %v48 = vadd.s32 %v47, %v45
    %vm49 = vcmp.lt.s32.totalorder %v48, 8
    %v50 = vsel %vm49, %v43, 0.0
    %vm51 = vcmask 7168
    %v52 = vsel %vm51, %v50, 0.0
    %53 = vadd.xlane.f32.xlu0 %v52
    %v54 = vpop.xlane.xlu0 %53
    %v55 = vrot.slane %v54, 4
    %v56 = vadd.f32 %v54, %v55
    %v57 = vrot.slane %v56, 2
    %v58 = vadd.f32 %v56, %v57
    %v59 = vrot.slane %v58, 1
    %v60 = vadd.f32 %v58, %v59
    %s61 = vtos %v60
    %s62 = scalar_lea.smem [#allocation2], 0
    %63 = sst [smem:[%s62]] %s61
    // Predicated region
    $region10: #{tpu_custom_call.1} parent=1 // pred_check
      _
    $region11: #{tpu_custom_call.1} parent=1 // pred_check_branch
      %65 = sbr.rel (0) target = $region13
    $region12: #{tpu_custom_call.1} parent=1 // pred_region
      %s67 = ssub.s32 16, 16
      %68 = vsyncadd [#allocation3], %s67
      %71 = dma.smem_to_hbm [#allocation2], 16, %s2, [#allocation3]
    $region13: #{tpu_custom_call.1} parent=1 // pred_fallthru
      _
    // Predicated region
    $region14: #{tpu_custom_call.1} parent=1 // pred_check
      _
    $region15: #{tpu_custom_call.1} parent=1 // pred_check_branch
      %73 = sbr.rel (0) target = $region17
    $region16: #{tpu_custom_call.1} parent=1 // pred_region
      %74 = dma.done [#allocation3], 16
    $region17: #{tpu_custom_call.1} parent=1 // pred_fallthru
      _
    %75 = sfence
    %76 = vsyncpa [#allocation3], 1

</llo_original>
